<compile_context>
chip_gen: v7x
topology: tpu7x:2x2x1
jax: 0.10.0
libtpu: 0.0.40
codegen_flags: <defaults>
</compile_context>

<pallas_src>
import functools

import numpy as np

import jax
import jax.numpy as jnp
from jax.experimental import pallas as pl
from jax.experimental.pallas import tpu as pltpu

EPS = 1e-5  # nn.GroupNorm default eps


def _round_up(x, m):
    return (x + m - 1) // m * m


def _pick_batch_block(n, cap=4):
    """Largest divisor of n that is <= cap while keeping the grid >= 2."""
    best = 1
    for b in range(2, min(cap, n) + 1):
        if n % b == 0 and n // b >= 2:
            best = b
    return best


def _tap_masks_and_shifts(height, width):
    """Grid-invariant boundary masks (9,1,P) and lane-roll shifts for a
    3x3 / stride-1 / pad-1 conv on a row-major flattened (H*W,) axis."""
    p = height * width
    pos = np.arange(p)
    row = pos // width
    col = pos % width
    masks = np.ones((9, p), np.float32)
    shifts = []
    for t in range(9):
        dh, dw = t // 3 - 1, t % 3 - 1
        delta = dh * width + dw                 # shifted[p] = x[p + delta]
        shifts.append(int((-delta) % p))
        m = np.ones(p, np.float32)
        if dh == -1:
            m *= (row >= 1)
        elif dh == 1:
            m *= (row < height - 1)
        if dw == -1:
            m *= (col >= 1)
        elif dw == 1:
            m *= (col < width - 1)
        masks[t] = m
    return jnp.asarray(masks).reshape(9, 1, p), tuple(shifts)


def _per_tap_weight(w_hwio, c_in_p, c_out_p):
    """HWIO (3,3,Ci,Co) -> zero-padded per-tap (9, Co_p, Ci_p) matrices."""
    _, _, ci, co = w_hwio.shape
    w = jnp.transpose(w_hwio, (0, 1, 3, 2)).reshape(9, co, ci)
    return jnp.pad(w, ((0, 0), (0, c_out_p - co), (0, c_in_p - ci)))


def _pack_affine(vecs, c, c_p):
    """List of (c,) vectors -> (len(vecs), c_p, 1), zero padded."""
    arr = jnp.stack([jnp.pad(v, (0, c_p - c)) for v in vecs], axis=0)
    return arr.reshape(len(vecs), c_p, 1)


def _conv3x3_tapfused(x_cp, w_full, masks, shifts, max_k=128):
    """3x3 / stride-1 / pad-1 conv via big-K tap fusion.

    x_cp:   (C, P) activations (padding handled by multiplicative masks).
    w_full: (Cout, 9*C) weights, K ordered tap-major / channel-minor.
    masks:  list of 9 loaded (1, P) masks (None for the center tap).
    Returns (Cout, P) f32.  K is chunked at max_k (=128, v5e-safe).
    """
    c, _ = x_cp.shape
    taps_per_dot = max(1, max_k // c)
    acc = None
    for g0 in range(0, 9, taps_per_dot):
        g_taps = list(range(g0, min(9, g0 + taps_per_dot)))
        chunks = []
        for t in g_taps:
            shifted = x_cp if shifts[t] == 0 else pltpu.roll(x_cp, shift=shifts[t], axis=1)
            if masks[t] is not None:
                shifted = shifted * masks[t]
            chunks.append(shifted)
        stack = chunks[0] if len(chunks) == 1 else jnp.concatenate(chunks, axis=0)
        w_chunk = w_full[:, g0 * c:(g0 + len(g_taps)) * c]
        part = jnp.dot(w_chunk, stack, preferred_element_type=jnp.float32)
        acc = part if acc is None else acc + part
    return acc


def basic_block_kernel(x_ref, gp_in_ref, gp_out_ref, mask_ref, w1_ref, wf_ref, o_ref, *,
                       shifts, c_in, c_out, c_in_p, c_out_p, batch_block):
    p = x_ref.shape[-1]
    n_in = float(c_in * p)     # GN counts use TRUE channel counts (pad rows are zero)
    n_out = float(c_out * p)

    # Grid-invariant loads hoisted out of the per-sample loop.
    w1 = w1_ref[...]                                    # (Cout_p, 9*Cin_p)
    wf = wf_ref[...]                                    # (Cout_p, 9*(Cout_p+Cin_p))
    g1, b1, gs, bs = (gp_in_ref[k] for k in range(4))   # (Cin_p, 1) each
    g2, b2 = gp_out_ref[0], gp_out_ref[1]               # (Cout_p, 1) each
    masks = [None if t == 4 else mask_ref[t] for t in range(9)]  # (1, P) each

    for b in range(batch_block):                        # static unroll over samples
        x = x_ref[b].astype(jnp.float32)                # (Cin_p, P)

        # Shared GN(1,Cin) stats for gn1 and the shortcut GN: one cross-lane
        # reduce pass over the sublane-stacked [x; x*x].
        rows = jnp.sum(jnp.concatenate([x, x * x], axis=0), axis=1, keepdims=True)
        s1 = jnp.sum(rows[:c_in_p])
        s2 = jnp.sum(rows[c_in_p:])
        mean = s1 / n_in
        var = jnp.maximum(s2 / n_in - mean * mean, 0.0)
        inv = jax.lax.rsqrt(var + EPS)
        xn = (x - mean) * inv

        r = jnp.maximum(xn * g1 + b1, 0.0)              # gn1 + relu       (Cin_p, P)
        s = jnp.maximum(xn * gs + bs, 0.0)              # shortcut gn+relu (Cin_p, P)

        # conv1 (residual branch): single big-K dot (K = 9*Cin_p).
        c1 = _conv3x3_tapfused(r, w1, masks, shifts)    # (Cout_p, P)

        # gn2 + relu (single cross-lane reduce pass, same trick).
        rows2 = jnp.sum(jnp.concatenate([c1, c1 * c1], axis=0), axis=1, keepdims=True)
        t1 = jnp.sum(rows2[:c_out_p])
        t2 = jnp.sum(rows2[c_out_p:])
        m2 = t1 / n_out
        v2 = jnp.maximum(t2 / n_out - m2 * m2, 0.0)
        inv2 = jax.lax.rsqrt(v2 + EPS)
        r2 = jnp.maximum((c1 - m2) * inv2 * g2 + b2, 0.0)   # (Cout_p, P)

        # Fused conv2 + shortcut conv: aligned [r2; s] stack against [w2 | ws]
        # directly yields c2 + cs (K chunked at 128 inside the helper).
        xf = jnp.concatenate([r2, s], axis=0)           # (Cout_p + Cin_p, P)
        out = _conv3x3_tapfused(xf, wf, masks, shifts)  # (Cout_p, P)

        o_ref[b] = out.astype(o_ref.dtype)


def basic_block_pallas(x_nchw, params, *, batch_block=None):
    """x_nchw: (N, Cin, H, W) -> (N, Cout, H, W); stride=1 projection shortcut."""
    n, c_in, h, w = x_nchw.shape
    c_out = params["w1"].shape[-1]
    p = h * w
    c_in_p = _round_up(c_in, 8)
    c_out_p = _round_up(c_out, 8)

    if batch_block is None:
        batch_block = _pick_batch_block(n)
    assert n % batch_block == 0

    # Flattened NCHW == lane-dense (C, H*W); pure reshape + zero channel pad.
    x = x_nchw.reshape(n, c_in, p)
    if c_in_p != c_in:
        x = jnp.pad(x, ((0, 0), (0, c_in_p - c_in), (0, 0)))

    mask_arr, shifts = _tap_masks_and_shifts(h, w)

    # Conv weights -> big-K layout (Cout_p, 9*C), K tap-major / channel-minor.
    w1_taps = _per_tap_weight(params["w1"], c_in_p, c_out_p)          # (9,Co_p,Ci_p)
    w1_k = jnp.transpose(w1_taps, (1, 0, 2)).reshape(c_out_p, 9 * c_in_p)

    w2_taps = _per_tap_weight(params["w2"], c_out_p, c_out_p)
    ws_taps = _per_tap_weight(params["ws"], c_in_p, c_out_p)
    wf_taps = jnp.concatenate([w2_taps, ws_taps], axis=2)             # (9,Co_p,Co_p+Ci_p)
    wf_k = jnp.transpose(wf_taps, (1, 0, 2)).reshape(c_out_p, 9 * (c_out_p + c_in_p))

    # GN affine params packed into two grid-invariant inputs.
    gp_in = _pack_affine([params["gn1_w"], params["gn1_b"],
                          params["gns_w"], params["gns_b"]], c_in, c_in_p)
    gp_out = _pack_affine([params["gn2_w"], params["gn2_b"]], c_out, c_out_p)

    kernel = functools.partial(
        basic_block_kernel, shifts=shifts, c_in=c_in, c_out=c_out,
        c_in_p=c_in_p, c_out_p=c_out_p, batch_block=batch_block)

    out = pl.pallas_call(
        kernel,
        out_shape=jax.ShapeDtypeStruct((n, c_out_p, p), x_nchw.dtype),
        grid=(n // batch_block,),
        in_specs=[
            pl.BlockSpec((batch_block, c_in_p, p), lambda i: (i, 0, 0)),     # x
            pl.BlockSpec((4, c_in_p, 1), lambda i: (0, 0, 0)),               # gn1/gns affine
            pl.BlockSpec((2, c_out_p, 1), lambda i: (0, 0, 0)),              # gn2 affine
            pl.BlockSpec((9, 1, p), lambda i: (0, 0, 0)),                    # tap masks
            pl.BlockSpec((c_out_p, 9 * c_in_p), lambda i: (0, 0)),           # conv1 weights
            pl.BlockSpec((c_out_p, 9 * (c_out_p + c_in_p)), lambda i: (0, 0)),  # fused conv2+shortcut
        ],
        out_specs=pl.BlockSpec((batch_block, c_out_p, p), lambda i: (i, 0, 0)),
        compiler_params=pltpu.CompilerParams(
            dimension_semantics=("parallel",),      # independent batch blocks
            vmem_limit_bytes=32 * 1024 * 1024,
        ),
    )(x, gp_in, gp_out, mask_arr, w1_k, wf_k)

    out = out[:, :c_out, :]
    return out.reshape(n, c_out, h, w)


# ----------------------------- pure-JAX reference -----------------------------
def _ref_gn_relu(x_nhwc, gamma, beta):
    mean = jnp.mean(x_nhwc, axis=(1, 2, 3), keepdims=True)
    var = jnp.mean((x_nhwc - mean) ** 2, axis=(1, 2, 3), keepdims=True)
    y = (x_nhwc - mean) * jax.lax.rsqrt(var + EPS)
    y = y * gamma.reshape(1, 1, 1, -1) + beta.reshape(1, 1, 1, -1)
    return jnp.maximum(y, 0.0)


def _ref_conv3x3(x_nhwc, w_hwio):
    return jax.lax.conv_general_dilated(
        x_nhwc, w_hwio, window_strides=(1, 1), padding=((1, 1), (1, 1)),
        dimension_numbers=("NHWC", "HWIO", "NHWC"))


def basic_block_reference(x_nchw, p):
    x = jnp.transpose(x_nchw, (0, 2, 3, 1))
    r = _ref_conv3x3(_ref_gn_relu(x, p["gn1_w"], p["gn1_b"]), p["w1"])
    r = _ref_conv3x3(_ref_gn_relu(r, p["gn2_w"], p["gn2_b"]), p["w2"])
    s = _ref_conv3x3(_ref_gn_relu(x, p["gns_w"], p["gns_b"]), p["ws"])
    return jnp.transpose(r + s, (0, 3, 1, 2))


# ----------------------------------- main --------------------------------------
if __name__ == "__main__":
    N, C_IN, C_OUT, H, W = 2, 4, 8, 16, 16   # stride=1, Cin != Cout => conv shortcut

    key = jax.random.PRNGKey(0)
    ks = jax.random.split(key, 8)
    x = jax.random.normal(ks[0], (N, C_IN, H, W), jnp.float32)

    params = {
        "gn1_w": 1.0 + 0.1 * jax.random.normal(ks[1], (C_IN,), jnp.float32),
        "gn1_b": 0.1 * jax.random.normal(ks[2], (C_IN,), jnp.float32),
        "gn2_w": 1.0 + 0.1 * jax.random.normal(ks[3], (C_OUT,), jnp.float32),
        "gn2_b": 0.1 * jax.random.normal(ks[4], (C_OUT,), jnp.float32),
        "gns_w": jnp.ones((C_IN,), jnp.float32),
        "gns_b": jnp.zeros((C_IN,), jnp.float32),
        # Conv weights in HWIO.
        "w1": 0.1 * jax.random.normal(ks[5], (3, 3, C_IN, C_OUT), jnp.float32),
        "w2": 0.1 * jax.random.normal(ks[6], (3, 3, C_OUT, C_OUT), jnp.float32),
        "ws": 0.1 * jax.random.normal(ks[7], (3, 3, C_IN, C_OUT), jnp.float32),
    }

    out = jax.block_until_ready(basic_block_pallas(x, params))
    ref = jax.block_until_ready(basic_block_reference(x, params))

    assert out.shape == (N, C_OUT, H, W), out.shape
    assert jnp.allclose(out, ref, rtol=1e-4, atol=1e-4), float(jnp.max(jnp.abs(out - ref)))

    print("KERNEL_OK")
</pallas_src>

<mosaic_0001>
module attributes {stable_mosaic.version = 11 : i64} {
  func.func @basic_block_kernel(%arg0: i32, %arg1: memref<1x8x256xf32, #tpu.memory_space<vmem>>, %arg2: memref<4x8x1xf32, #tpu.memory_space<vmem>>, %arg3: memref<2x8x1xf32, #tpu.memory_space<vmem>>, %arg4: memref<9x1x256xf32, #tpu.memory_space<vmem>>, %arg5: memref<8x72xf32, #tpu.memory_space<vmem>>, %arg6: memref<8x144xf32, #tpu.memory_space<vmem>>, %arg7: memref<1x8x256xf32, #tpu.memory_space<vmem>>) attributes {dimension_semantics = [#tpu.dimension_semantics<parallel>], iteration_bounds = array<i64: 2>, scalar_prefetch = 0 : i64, scratch_operands = 0 : i64, tpu.core_type = #tpu.core_type<tc>, window_params = [{transform_indices = @transform_0, window_bounds = array<i64: 1, 8, 256>}, {pipeline_mode = #tpu.pipeline_mode<synchronous>, transform_indices = @transform_1, window_bounds = array<i64: 4, 8, 1>}, {pipeline_mode = #tpu.pipeline_mode<synchronous>, transform_indices = @transform_2, window_bounds = array<i64: 2, 8, 1>}, {pipeline_mode = #tpu.pipeline_mode<synchronous>, transform_indices = @transform_3, window_bounds = array<i64: 9, 1, 256>}, {pipeline_mode = #tpu.pipeline_mode<synchronous>, transform_indices = @transform_4, window_bounds = array<i64: 8, 72>}, {pipeline_mode = #tpu.pipeline_mode<synchronous>, transform_indices = @transform_5, window_bounds = array<i64: 8, 144>}, {transform_indices = @transform_6, window_bounds = array<i64: 1, 8, 256>}]} {
    %c0 = arith.constant 0 : index
    %c0_0 = arith.constant 0 : index
    %0 = vector.load %arg5[%c0, %c0_0] : memref<8x72xf32, #tpu.memory_space<vmem>>, vector<8x72xf32>
    %c0_1 = arith.constant 0 : index
    %c0_2 = arith.constant 0 : index
    %1 = vector.load %arg6[%c0_1, %c0_2] : memref<8x144xf32, #tpu.memory_space<vmem>>, vector<8x144xf32>
    %c0_3 = arith.constant 0 : index
    %c0_4 = arith.constant 0 : index
    %c0_5 = arith.constant 0 : index
    %2 = vector.load %arg2[%c0_3, %c0_4, %c0_5] : memref<4x8x1xf32, #tpu.memory_space<vmem>>, vector<1x8x1xf32>
    %3 = vector.shape_cast %2 : vector<1x8x1xf32> to vector<8x1xf32>
    %c1 = arith.constant 1 : index
    %c0_6 = arith.constant 0 : index
    %c0_7 = arith.constant 0 : index
    %4 = vector.load %arg2[%c1, %c0_6, %c0_7] : memref<4x8x1xf32, #tpu.memory_space<vmem>>, vector<1x8x1xf32>
    %5 = vector.shape_cast %4 : vector<1x8x1xf32> to vector<8x1xf32>
    %c2 = arith.constant 2 : index
    %c0_8 = arith.constant 0 : index
    %c0_9 = arith.constant 0 : index
    %6 = vector.load %arg2[%c2, %c0_8, %c0_9] : memref<4x8x1xf32, #tpu.memory_space<vmem>>, vector<1x8x1xf32>
    %7 = vector.shape_cast %6 : vector<1x8x1xf32> to vector<8x1xf32>
    %c3 = arith.constant 3 : index
    %c0_10 = arith.constant 0 : index
    %c0_11 = arith.constant 0 : index
    %8 = vector.load %arg2[%c3, %c0_10, %c0_11] : memref<4x8x1xf32, #tpu.memory_space<vmem>>, vector<1x8x1xf32>
    %9 = vector.shape_cast %8 : vector<1x8x1xf32> to vector<8x1xf32>
    %c0_12 = arith.constant 0 : index
    %c0_13 = arith.constant 0 : index
    %c0_14 = arith.constant 0 : index
    %10 = vector.load %arg3[%c0_12, %c0_13, %c0_14] : memref<2x8x1xf32, #tpu.memory_space<vmem>>, vector<1x8x1xf32>
    %11 = vector.shape_cast %10 : vector<1x8x1xf32> to vector<8x1xf32>
    %c1_15 = arith.constant 1 : index
    %c0_16 = arith.constant 0 : index
    %c0_17 = arith.constant 0 : index
    %12 = vector.load %arg3[%c1_15, %c0_16, %c0_17] : memref<2x8x1xf32, #tpu.memory_space<vmem>>, vector<1x8x1xf32>
    %13 = vector.shape_cast %12 : vector<1x8x1xf32> to vector<8x1xf32>
    %c0_18 = arith.constant 0 : index
    %c0_19 = arith.constant 0 : index
    %c0_20 = arith.constant 0 : index
    %14 = vector.load %arg4[%c0_18, %c0_19, %c0_20] : memref<9x1x256xf32, #tpu.memory_space<vmem>>, vector<1x1x256xf32>
    %15 = vector.shape_cast %14 : vector<1x1x256xf32> to vector<1x256xf32>
    %c1_21 = arith.constant 1 : index
    %c0_22 = arith.constant 0 : index
    %c0_23 = arith.constant 0 : index
    %16 = vector.load %arg4[%c1_21, %c0_22, %c0_23] : memref<9x1x256xf32, #tpu.memory_space<vmem>>, vector<1x1x256xf32>
    %17 = vector.shape_cast %16 : vector<1x1x256xf32> to vector<1x256xf32>
    %c2_24 = arith.constant 2 : index
    %c0_25 = arith.constant 0 : index
    %c0_26 = arith.constant 0 : index
    %18 = vector.load %arg4[%c2_24, %c0_25, %c0_26] : memref<9x1x256xf32, #tpu.memory_space<vmem>>, vector<1x1x256xf32>
    %19 = vector.shape_cast %18 : vector<1x1x256xf32> to vector<1x256xf32>
    %c3_27 = arith.constant 3 : index
    %c0_28 = arith.constant 0 : index
    %c0_29 = arith.constant 0 : index
    %20 = vector.load %arg4[%c3_27, %c0_28, %c0_29] : memref<9x1x256xf32, #tpu.memory_space<vmem>>, vector<1x1x256xf32>
    %21 = vector.shape_cast %20 : vector<1x1x256xf32> to vector<1x256xf32>
    %c5 = arith.constant 5 : index
    %c0_30 = arith.constant 0 : index
    %c0_31 = arith.constant 0 : index
    %22 = vector.load %arg4[%c5, %c0_30, %c0_31] : memref<9x1x256xf32, #tpu.memory_space<vmem>>, vector<1x1x256xf32>
    %23 = vector.shape_cast %22 : vector<1x1x256xf32> to vector<1x256xf32>
    %c6 = arith.constant 6 : index
    %c0_32 = arith.constant 0 : index
    %c0_33 = arith.constant 0 : index
    %24 = vector.load %arg4[%c6, %c0_32, %c0_33] : memref<9x1x256xf32, #tpu.memory_space<vmem>>, vector<1x1x256xf32>
    %25 = vector.shape_cast %24 : vector<1x1x256xf32> to vector<1x256xf32>
    %c7 = arith.constant 7 : index
    %c0_34 = arith.constant 0 : index
    %c0_35 = arith.constant 0 : index
    %26 = vector.load %arg4[%c7, %c0_34, %c0_35] : memref<9x1x256xf32, #tpu.memory_space<vmem>>, vector<1x1x256xf32>
    %27 = vector.shape_cast %26 : vector<1x1x256xf32> to vector<1x256xf32>
    %c8 = arith.constant 8 : index
    %c0_36 = arith.constant 0 : index
    %c0_37 = arith.constant 0 : index
    %28 = vector.load %arg4[%c8, %c0_36, %c0_37] : memref<9x1x256xf32, #tpu.memory_space<vmem>>, vector<1x1x256xf32>
    %29 = vector.shape_cast %28 : vector<1x1x256xf32> to vector<1x256xf32>
    %c0_38 = arith.constant 0 : index
    %c0_39 = arith.constant 0 : index
    %c0_40 = arith.constant 0 : index
    %30 = vector.load %arg1[%c0_38, %c0_39, %c0_40] : memref<1x8x256xf32, #tpu.memory_space<vmem>>, vector<1x8x256xf32>
    %31 = vector.shape_cast %30 : vector<1x8x256xf32> to vector<8x256xf32>
    %32 = arith.mulf %31, %31 : vector<8x256xf32>
    %33 = tpu.concatenate %31, %32 in 0 : vector<8x256xf32>, vector<8x256xf32> -> vector<16x256xf32>
    %cst = arith.constant dense<0.000000e+00> : vector<16xf32>
    %34 = vector.multi_reduction <add>, %33, %cst [1] : vector<16x256xf32> to vector<16xf32>
    %35 = vector.shape_cast %34 : vector<16xf32> to vector<16x1xf32>
    %36 = vector.extract_strided_slice %35 {offsets = [0, 0], sizes = [8, 1], strides = [1, 1]} : vector<16x1xf32> to vector<8x1xf32>
    %37 = vector.shape_cast %36 : vector<8x1xf32> to vector<1x8x1xf32>
    %cst_41 = arith.constant dense<0.000000e+00> : vector<1xf32>
    %38 = vector.multi_reduction <add>, %37, %cst_41 [1, 2] : vector<1x8x1xf32> to vector<1xf32>
    %39 = vector.shape_cast %38 : vector<1xf32> to vector<1x1x1xf32>
    %40 = vector.extract %39[0, 0, 0] : f32 from vector<1x1x1xf32>
    %41 = vector.extract_strided_slice %35 {offsets = [8, 0], sizes = [8, 1], strides = [1, 1]} : vector<16x1xf32> to vector<8x1xf32>
    %42 = vector.shape_cast %41 : vector<8x1xf32> to vector<1x8x1xf32>
    %cst_42 = arith.constant dense<0.000000e+00> : vector<1xf32>
    %43 = vector.multi_reduction <add>, %42, %cst_42 [1, 2] : vector<1x8x1xf32> to vector<1xf32>
    %44 = vector.shape_cast %43 : vector<1xf32> to vector<1x1x1xf32>
    %45 = vector.extract %44[0, 0, 0] : f32 from vector<1x1x1xf32>
    %cst_43 = arith.constant 1.024000e+03 : f32
    %46 = arith.divf %40, %cst_43 : f32
    %cst_44 = arith.constant 1.024000e+03 : f32
    %47 = arith.divf %45, %cst_44 : f32
    %48 = arith.mulf %46, %46 : f32
    %49 = arith.subf %47, %48 : f32
    %cst_45 = arith.constant 0.000000e+00 : f32
    %50 = arith.maximumf %49, %cst_45 : f32
    %cst_46 = arith.constant 9.99999974E-6 : f32
    %51 = arith.addf %50, %cst_46 : f32
    %52 = math.rsqrt %51 : f32
    %53 = vector.broadcast %46 : f32 to vector<8x256xf32>
    %54 = arith.subf %31, %53 : vector<8x256xf32>
    %55 = vector.broadcast %52 : f32 to vector<8x256xf32>
    %56 = arith.mulf %54, %55 : vector<8x256xf32>
    %57 = vector.broadcast %3 : vector<8x1xf32> to vector<8x256xf32>
    %58 = arith.mulf %56, %57 : vector<8x256xf32>
    %59 = vector.broadcast %5 : vector<8x1xf32> to vector<8x256xf32>
    %60 = arith.addf %58, %59 : vector<8x256xf32>
    %cst_47 = arith.constant 0.000000e+00 : f32
    %61 = vector.broadcast %cst_47 : f32 to vector<8x256xf32>
    %62 = arith.maximumf %60, %61 : vector<8x256xf32>
    %63 = vector.broadcast %7 : vector<8x1xf32> to vector<8x256xf32>
    %64 = arith.mulf %56, %63 : vector<8x256xf32>
    %65 = vector.broadcast %9 : vector<8x1xf32> to vector<8x256xf32>
    %66 = arith.addf %64, %65 : vector<8x256xf32>
    %cst_48 = arith.constant 0.000000e+00 : f32
    %67 = vector.broadcast %cst_48 : f32 to vector<8x256xf32>
    %68 = arith.maximumf %66, %67 : vector<8x256xf32>
    %c17_i32 = arith.constant 17 : i32
    %69 = tpu.dynamic_rotate %62 by %c17_i32 dim 1 : vector<8x256xf32>, i32 -> vector<8x256xf32>
    %70 = vector.broadcast %15 : vector<1x256xf32> to vector<8x256xf32>
    %71 = arith.mulf %69, %70 : vector<8x256xf32>
    %c16_i32 = arith.constant 16 : i32
    %72 = tpu.dynamic_rotate %62 by %c16_i32 dim 1 : vector<8x256xf32>, i32 -> vector<8x256xf32>
    %73 = vector.broadcast %17 : vector<1x256xf32> to vector<8x256xf32>
    %74 = arith.mulf %72, %73 : vector<8x256xf32>
    %c15_i32 = arith.constant 15 : i32
    %75 = tpu.dynamic_rotate %62 by %c15_i32 dim 1 : vector<8x256xf32>, i32 -> vector<8x256xf32>
    %76 = vector.broadcast %19 : vector<1x256xf32> to vector<8x256xf32>
    %77 = arith.mulf %75, %76 : vector<8x256xf32>
    %c1_i32 = arith.constant 1 : i32
    %78 = tpu.dynamic_rotate %62 by %c1_i32 dim 1 : vector<8x256xf32>, i32 -> vector<8x256xf32>
    %79 = vector.broadcast %21 : vector<1x256xf32> to vector<8x256xf32>
    %80 = arith.mulf %78, %79 : vector<8x256xf32>
    %c255_i32 = arith.constant 255 : i32
    %81 = tpu.dynamic_rotate %62 by %c255_i32 dim 1 : vector<8x256xf32>, i32 -> vector<8x256xf32>
    %82 = vector.broadcast %23 : vector<1x256xf32> to vector<8x256xf32>
    %83 = arith.mulf %81, %82 : vector<8x256xf32>
    %c241_i32 = arith.constant 241 : i32
    %84 = tpu.dynamic_rotate %62 by %c241_i32 dim 1 : vector<8x256xf32>, i32 -> vector<8x256xf32>
    %85 = vector.broadcast %25 : vector<1x256xf32> to vector<8x256xf32>
    %86 = arith.mulf %84, %85 : vector<8x256xf32>
    %c240_i32 = arith.constant 240 : i32
    %87 = tpu.dynamic_rotate %62 by %c240_i32 dim 1 : vector<8x256xf32>, i32 -> vector<8x256xf32>
    %88 = vector.broadcast %27 : vector<1x256xf32> to vector<8x256xf32>
    %89 = arith.mulf %87, %88 : vector<8x256xf32>
    %c239_i32 = arith.constant 239 : i32
    %90 = tpu.dynamic_rotate %62 by %c239_i32 dim 1 : vector<8x256xf32>, i32 -> vector<8x256xf32>
    %91 = vector.broadcast %29 : vector<1x256xf32> to vector<8x256xf32>
    %92 = arith.mulf %90, %91 : vector<8x256xf32>
    %93 = tpu.concatenate %71, %74, %77, %80, %62, %83, %86, %89, %92 in 0 : vector<8x256xf32>, vector<8x256xf32>, vector<8x256xf32>, vector<8x256xf32>, vector<8x256xf32>, vector<8x256xf32>, vector<8x256xf32>, vector<8x256xf32>, vector<8x256xf32> -> vector<72x256xf32>
    %cst_49 = arith.constant dense<0.000000e+00> : vector<8x256xf32>
    %94 = tpu.matmul %0, %93, %cst_49 {dimension_numbers = #tpu.dot_dimension_numbers<[1], [0], [0], [1], [0, 0, 1, 1], [], []>} : vector<8x72xf32>, vector<72x256xf32>, vector<8x256xf32> -> vector<8x256xf32>
    %95 = arith.mulf %94, %94 : vector<8x256xf32>
    %96 = tpu.concatenate %94, %95 in 0 : vector<8x256xf32>, vector<8x256xf32> -> vector<16x256xf32>
    %cst_50 = arith.constant dense<0.000000e+00> : vector<16xf32>
    %97 = vector.multi_reduction <add>, %96, %cst_50 [1] : vector<16x256xf32> to vector<16xf32>
    %98 = vector.shape_cast %97 : vector<16xf32> to vector<16x1xf32>
    %99 = vector.extract_strided_slice %98 {offsets = [0, 0], sizes = [8, 1], strides = [1, 1]} : vector<16x1xf32> to vector<8x1xf32>
    %100 = vector.shape_cast %99 : vector<8x1xf32> to vector<1x8x1xf32>
    %cst_51 = arith.constant dense<0.000000e+00> : vector<1xf32>
    %101 = vector.multi_reduction <add>, %100, %cst_51 [1, 2] : vector<1x8x1xf32> to vector<1xf32>
    %102 = vector.shape_cast %101 : vector<1xf32> to vector<1x1x1xf32>
    %103 = vector.extract %102[0, 0, 0] : f32 from vector<1x1x1xf32>
    %104 = vector.extract_strided_slice %98 {offsets = [8, 0], sizes = [8, 1], strides = [1, 1]} : vector<16x1xf32> to vector<8x1xf32>
    %105 = vector.shape_cast %104 : vector<8x1xf32> to vector<1x8x1xf32>
    %cst_52 = arith.constant dense<0.000000e+00> : vector<1xf32>
    %106 = vector.multi_reduction <add>, %105, %cst_52 [1, 2] : vector<1x8x1xf32> to vector<1xf32>
    %107 = vector.shape_cast %106 : vector<1xf32> to vector<1x1x1xf32>
    %108 = vector.extract %107[0, 0, 0] : f32 from vector<1x1x1xf32>
    %cst_53 = arith.constant 2.048000e+03 : f32
    %109 = arith.divf %103, %cst_53 : f32
    %cst_54 = arith.constant 2.048000e+03 : f32
    %110 = arith.divf %108, %cst_54 : f32
    %111 = arith.mulf %109, %109 : f32
    %112 = arith.subf %110, %111 : f32
    %cst_55 = arith.constant 0.000000e+00 : f32
    %113 = arith.maximumf %112, %cst_55 : f32
    %cst_56 = arith.constant 9.99999974E-6 : f32
    %114 = arith.addf %113, %cst_56 : f32
    %115 = math.rsqrt %114 : f32
    %116 = vector.broadcast %109 : f32 to vector<8x256xf32>
    %117 = arith.subf %94, %116 : vector<8x256xf32>
    %118 = vector.broadcast %115 : f32 to vector<8x256xf32>
    %119 = arith.mulf %117, %118 : vector<8x256xf32>
    %120 = vector.broadcast %11 : vector<8x1xf32> to vector<8x256xf32>
    %121 = arith.mulf %119, %120 : vector<8x256xf32>
    %122 = vector.broadcast %13 : vector<8x1xf32> to vector<8x256xf32>
    %123 = arith.addf %121, %122 : vector<8x256xf32>
    %cst_57 = arith.constant 0.000000e+00 : f32
    %124 = vector.broadcast %cst_57 : f32 to vector<8x256xf32>
    %125 = arith.maximumf %123, %124 : vector<8x256xf32>
    %126 = tpu.concatenate %125, %68 in 0 : vector<8x256xf32>, vector<8x256xf32> -> vector<16x256xf32>
    %c17_i32_58 = arith.constant 17 : i32
    %127 = tpu.dynamic_rotate %126 by %c17_i32_58 dim 1 : vector<16x256xf32>, i32 -> vector<16x256xf32>
    %128 = vector.broadcast %15 : vector<1x256xf32> to vector<16x256xf32>
    %129 = arith.mulf %127, %128 : vector<16x256xf32>
    %c16_i32_59 = arith.constant 16 : i32
    %130 = tpu.dynamic_rotate %126 by %c16_i32_59 dim 1 : vector<16x256xf32>, i32 -> vector<16x256xf32>
    %131 = vector.broadcast %17 : vector<1x256xf32> to vector<16x256xf32>
    %132 = arith.mulf %130, %131 : vector<16x256xf32>
    %c15_i32_60 = arith.constant 15 : i32
    %133 = tpu.dynamic_rotate %126 by %c15_i32_60 dim 1 : vector<16x256xf32>, i32 -> vector<16x256xf32>
    %134 = vector.broadcast %19 : vector<1x256xf32> to vector<16x256xf32>
    %135 = arith.mulf %133, %134 : vector<16x256xf32>
    %c1_i32_61 = arith.constant 1 : i32
    %136 = tpu.dynamic_rotate %126 by %c1_i32_61 dim 1 : vector<16x256xf32>, i32 -> vector<16x256xf32>
    %137 = vector.broadcast %21 : vector<1x256xf32> to vector<16x256xf32>
    %138 = arith.mulf %136, %137 : vector<16x256xf32>
    %c255_i32_62 = arith.constant 255 : i32
    %139 = tpu.dynamic_rotate %126 by %c255_i32_62 dim 1 : vector<16x256xf32>, i32 -> vector<16x256xf32>
    %140 = vector.broadcast %23 : vector<1x256xf32> to vector<16x256xf32>
    %141 = arith.mulf %139, %140 : vector<16x256xf32>
    %c241_i32_63 = arith.constant 241 : i32
    %142 = tpu.dynamic_rotate %126 by %c241_i32_63 dim 1 : vector<16x256xf32>, i32 -> vector<16x256xf32>
    %143 = vector.broadcast %25 : vector<1x256xf32> to vector<16x256xf32>
    %144 = arith.mulf %142, %143 : vector<16x256xf32>
    %c240_i32_64 = arith.constant 240 : i32
    %145 = tpu.dynamic_rotate %126 by %c240_i32_64 dim 1 : vector<16x256xf32>, i32 -> vector<16x256xf32>
    %146 = vector.broadcast %27 : vector<1x256xf32> to vector<16x256xf32>
    %147 = arith.mulf %145, %146 : vector<16x256xf32>
    %148 = tpu.concatenate %129, %132, %135, %138, %126, %141, %144, %147 in 0 : vector<16x256xf32>, vector<16x256xf32>, vector<16x256xf32>, vector<16x256xf32>, vector<16x256xf32>, vector<16x256xf32>, vector<16x256xf32>, vector<16x256xf32> -> vector<128x256xf32>
    %149 = vector.extract_strided_slice %1 {offsets = [0, 0], sizes = [8, 128], strides = [1, 1]} : vector<8x144xf32> to vector<8x128xf32>
    %cst_65 = arith.constant dense<0.000000e+00> : vector<8x256xf32>
    %150 = tpu.matmul %149, %148, %cst_65 {dimension_numbers = #tpu.dot_dimension_numbers<[1], [0], [0], [1], [0, 0, 1, 1], [], []>} : vector<8x128xf32>, vector<128x256xf32>, vector<8x256xf32> -> vector<8x256xf32>
    %c239_i32_66 = arith.constant 239 : i32
    %151 = tpu.dynamic_rotate %126 by %c239_i32_66 dim 1 : vector<16x256xf32>, i32 -> vector<16x256xf32>
    %152 = vector.broadcast %29 : vector<1x256xf32> to vector<16x256xf32>
    %153 = arith.mulf %151, %152 : vector<16x256xf32>
    %154 = vector.extract_strided_slice %1 {offsets = [0, 128], sizes = [8, 16], strides = [1, 1]} : vector<8x144xf32> to vector<8x16xf32>
    %cst_67 = arith.constant dense<0.000000e+00> : vector<8x256xf32>
    %155 = tpu.matmul %154, %153, %cst_67 {dimension_numbers = #tpu.dot_dimension_numbers<[1], [0], [0], [1], [0, 0, 1, 1], [], []>} : vector<8x16xf32>, vector<16x256xf32>, vector<8x256xf32> -> vector<8x256xf32>
    %156 = arith.addf %150, %155 : vector<8x256xf32>
    %c0_68 = arith.constant 0 : index
    %c0_69 = arith.constant 0 : index
    %c0_70 = arith.constant 0 : index
    %157 = vector.load %arg7[%c0_68, %c0_69, %c0_70] : memref<1x8x256xf32, #tpu.memory_space<vmem>>, vector<1x8x256xf32>
    %158 = vector.shape_cast %157 : vector<1x8x256xf32> to vector<8x256xf32>
    %159 = vector.shape_cast %156 : vector<8x256xf32> to vector<1x8x256xf32>
    tpu.vector_store %arg7[%c0_68, %c0_69, %c0_70], %159 {strides = array<i32>} : memref<1x8x256xf32, #tpu.memory_space<vmem>>, vector<1x8x256xf32>,
    return
  }
  func.func @transform_0(%arg0: i32) -> (i32, i32, i32) {
    %c0_i32 = arith.constant 0 : i32
    %c0_i32_0 = arith.constant 0 : i32
    %c0_i32_1 = arith.constant 0 : i32
    return %arg0, %c0_i32, %c0_i32_0 : i32, i32, i32
  }
  func.func @transform_1(%arg0: i32) -> (i32, i32, i32) {
    %c0_i32 = arith.constant 0 : i32
    %c0_i32_0 = arith.constant 0 : i32
    %c0_i32_1 = arith.constant 0 : i32
    %c0_i32_2 = arith.constant 0 : i32
    return %c0_i32, %c0_i32_0, %c0_i32_1 : i32, i32, i32
  }
  func.func @transform_2(%arg0: i32) -> (i32, i32, i32) {
    %c0_i32 = arith.constant 0 : i32
    %c0_i32_0 = arith.constant 0 : i32
    %c0_i32_1 = arith.constant 0 : i32
    %c0_i32_2 = arith.constant 0 : i32
    return %c0_i32, %c0_i32_0, %c0_i32_1 : i32, i32, i32
  }
  func.func @transform_3(%arg0: i32) -> (i32, i32, i32) {
    %c0_i32 = arith.constant 0 : i32
    %c0_i32_0 = arith.constant 0 : i32
    %c0_i32_1 = arith.constant 0 : i32
    %c0_i32_2 = arith.constant 0 : i32
    return %c0_i32, %c0_i32_0, %c0_i32_1 : i32, i32, i32
  }
  func.func @transform_4(%arg0: i32) -> (i32, i32) {
    %c0_i32 = arith.constant 0 : i32
    %c0_i32_0 = arith.constant 0 : i32
    %c0_i32_1 = arith.constant 0 : i32
    return %c0_i32, %c0_i32_0 : i32, i32
  }
  func.func @transform_5(%arg0: i32) -> (i32, i32) {
    %c0_i32 = arith.constant 0 : i32
    %c0_i32_0 = arith.constant 0 : i32
    %c0_i32_1 = arith.constant 0 : i32
    return %c0_i32, %c0_i32_0 : i32, i32
  }
  func.func @transform_6(%arg0: i32) -> (i32, i32, i32) {
    %c0_i32 = arith.constant 0 : i32
    %c0_i32_0 = arith.constant 0 : i32
    %c0_i32_1 = arith.constant 0 : i32
    return %arg0, %c0_i32, %c0_i32_0 : i32, i32, i32
  }
}

</mosaic_0001>

<llo_original>
// kernel: tpu_custom_call.1
$region0: #{tpu_custom_call.1}
  #allocation0 [shape = 'u32[]', space=smem, size = 0x4, offset = 0x4, fixed_abs, tag = 'smem constant byte address 0x4 - core index']
  #allocation1 [shape = 'u32[144,128]{1,0:T(1,128)}', space=vmem, size = 0x12000, scoped, tag = 'internal scratch']
  %s0 = inlined_call_operand.vmem [shape: f32[2,8,256], index: 0, kind: input, shape index: {}]
  %s1 = inlined_call_operand.vmem [shape: f32[4,8,1], index: 1, kind: input, shape index: {}]
  %s2 = inlined_call_operand.vmem [shape: f32[2,8,1], index: 2, kind: input, shape index: {}]
  %s3 = inlined_call_operand.vmem [shape: f32[9,1,256], index: 3, kind: input, shape index: {}]
  %s4 = inlined_call_operand.hbm [shape: f32[8,72], index: 4, kind: input, shape index: {}]
  %s5 = inlined_call_operand.vmem [shape: f32[8,144], index: 5, kind: input, shape index: {}]
  %s6 = inlined_call_operand.hbm [shape: f32[2,8,256], index: 6, kind: output, shape index: {}]
  %s7 = sld [smem:[#allocation0]]
  $region61: #{tpu_custom_call.1} parent=0
    _
  %s9 = ssub.s32 1, %s7
  %s10 = scalar_select 0, %s9, %s7
  $region1: #{tpu_custom_call.1} parent=0
    #allocation2 [shape = 'u8[4096]{0}', space=vmem, size = 0x1000, scoped, tag = 'input window, operand 4, single buffered']
    #allocation3 [shape = 's32[2]{0}', space=sflag, size = 0x8, scoped, tag = 'scoped memory for tpu_custom_call.1']
    #allocation4 [shape = 's32[2]{0}', space=sflag, size = 0x8, scoped, tag = 'scoped memory for tpu_custom_call.1']
    #allocation5 [shape = 'u8[16384]{0}', space=vmem, size = 0x4000, scoped, tag = 'output window, operand 0']
    %11 = vsyncpa [#allocation3], 0
    %12 = vsyncpa [#allocation4], 0
    %s13 = scalar_lea.sflag [#allocation4], 1
    %14 = vsyncpa %s13, 0
    loop: start=0, step=1, limit=4
    $region2: #{tpu_custom_call.1} parent=1 // loop_pre_header
      _
    $region3: #{tpu_custom_call.1} parent=1 // loop_header
      %s16 = sphi 0, %s20
      %p17 = scmp.ge.s32.totalorder %s16, 4
      %s26 = sphi 0, %s28
      %s29 = sphi 0, %s26
      %s30 = sphi 0, %s29
      %s46 = sphi 0, %s30
      %s50 = sphi 0, %s50
      %s52 = sphi 0, %s50
      %s53 = sphi 0, %s52
      %s67 = sphi 0, %s53
      %s71 = sphi 0, %s71
      %s73 = sphi 0, %s71
      %s74 = sphi 0, %s73
      %s88 = sphi 0, %s74
      %s92 = sphi 0, %s92
      %s94 = sphi 0, %s92
      %s95 = sphi 0, %s94
      %s109 = sphi 0, %s95
      %s113 = sphi 0, %s113
      %s115 = sphi 0, %s113
      %s116 = sphi 0, %s115
      %s130 = sphi 0, %s116
      %s134 = sphi 0, %s134
      %s136 = sphi 0, %s134
      %s137 = sphi 0, %s136
      %s151 = sphi 0, %s137
      %s157 = sphi 0, %s159
      %s160 = sphi 0, %s157
      %s161 = sphi 0, %s160
      %s177 = sphi 0, %s161
    $region4: #{tpu_custom_call.1} parent=1 // loop_header_branch
      %19 = sbr.rel (%p17) target = $region8
    $region5: #{tpu_custom_call.1} parent=1 // loop_body
      %s21 = ssub.s32 %s16, 1
      %s22 = ssub.s32 %s16, 2
      %s23 = sadd.s32 %s16, 1
      %s24 = ssub.s32 %s16, %s23
      %p25 = scmp.eq.s32.totalorder %s24, 0
      %s27 = sadd.s32 %s26, 1
      %s28 = scalar_select %p25, %s26, %s27
      %p31 = pneg %p25
      %p32 = scmp.eq.s32.totalorder %s16, 1
      %p33 = por %p31, %p32
      %p34 = scmp.ne.s32.totalorder %s26, %s29
      %p35 = scmp.eq.s32.totalorder %s16, 0
      %p36 = por %p34, %p35
      %p37 = scmp.ne.s32.totalorder %s26, %s29
      %p38 = scmp.eq.s32.totalorder %s21, 1
      %p39 = por %p37, %p38
      %p40 = scmp.ne.s32.totalorder %s29, %s30
      %p41 = scmp.eq.s32.totalorder %s21, 0
      %p42 = por %p40, %p41
      %p43 = scmp.ne.s32.totalorder %s29, %s30
      %p44 = scmp.eq.s32.totalorder %s22, 1
      %p45 = por %p43, %p44
      %p47 = scmp.ne.s32.totalorder %s30, %s46
      %p48 = scmp.eq.s32.totalorder %s22, 0
      %p49 = por %p47, %p48
      %s51 = sadd.s32 %s50, 1
      %p54 = scmp.eq.s32.totalorder %s16, 1
      %p55 = scmp.ne.s32.totalorder %s50, %s52
      %p56 = scmp.eq.s32.totalorder %s16, 0
      %p57 = por %p55, %p56
      %p58 = scmp.ne.s32.totalorder %s50, %s52
      %p59 = scmp.eq.s32.totalorder %s21, 1
      %p60 = por %p58, %p59
      %p61 = scmp.ne.s32.totalorder %s52, %s53
      %p62 = scmp.eq.s32.totalorder %s21, 0
      %p63 = por %p61, %p62
      %p64 = scmp.ne.s32.totalorder %s52, %s53
      %p65 = scmp.eq.s32.totalorder %s22, 1
      %p66 = por %p64, %p65
      %p68 = scmp.ne.s32.totalorder %s53, %s67
      %p69 = scmp.eq.s32.totalorder %s22, 0
      %p70 = por %p68, %p69
      %s72 = sadd.s32 %s71, 1
      %p75 = scmp.eq.s32.totalorder %s16, 1
      %p76 = scmp.ne.s32.totalorder %s71, %s73
      %p77 = scmp.eq.s32.totalorder %s16, 0
      %p78 = por %p76, %p77
      %p79 = scmp.ne.s32.totalorder %s71, %s73
      %p80 = scmp.eq.s32.totalorder %s21, 1
      %p81 = por %p79, %p80
      %p82 = scmp.ne.s32.totalorder %s73, %s74
      %p83 = scmp.eq.s32.totalorder %s21, 0
      %p84 = por %p82, %p83
      %p85 = scmp.ne.s32.totalorder %s73, %s74
      %p86 = scmp.eq.s32.totalorder %s22, 1
      %p87 = por %p85, %p86
      %p89 = scmp.ne.s32.totalorder %s74, %s88
      %p90 = scmp.eq.s32.totalorder %s22, 0
      %p91 = por %p89, %p90
      %s93 = sadd.s32 %s92, 1
      %p96 = scmp.eq.s32.totalorder %s16, 1
      %p97 = scmp.ne.s32.totalorder %s92, %s94
      %p98 = scmp.eq.s32.totalorder %s16, 0
      %p99 = por %p97, %p98
      %p100 = scmp.ne.s32.totalorder %s92, %s94
      %p101 = scmp.eq.s32.totalorder %s21, 1
      %p102 = por %p100, %p101
      %p103 = scmp.ne.s32.totalorder %s94, %s95
      %p104 = scmp.eq.s32.totalorder %s21, 0
      %p105 = por %p103, %p104
      %p106 = scmp.ne.s32.totalorder %s94, %s95
      %p107 = scmp.eq.s32.totalorder %s22, 1
      %p108 = por %p106, %p107
      %p110 = scmp.ne.s32.totalorder %s95, %s109
      %p111 = scmp.eq.s32.totalorder %s22, 0
      %p112 = por %p110, %p111
      %s114 = sadd.s32 %s113, 1
      %p117 = scmp.eq.s32.totalorder %s16, 1
      %p118 = scmp.ne.s32.totalorder %s113, %s115
      %p119 = scmp.eq.s32.totalorder %s16, 0
      %p120 = por %p118, %p119
      %p121 = scmp.ne.s32.totalorder %s113, %s115
      %p122 = scmp.eq.s32.totalorder %s21, 1
      %p123 = por %p121, %p122
      %p124 = scmp.ne.s32.totalorder %s115, %s116
      %p125 = scmp.eq.s32.totalorder %s21, 0
      %p126 = por %p124, %p125
      %p127 = scmp.ne.s32.totalorder %s115, %s116
      %p128 = scmp.eq.s32.totalorder %s22, 1
      %p129 = por %p127, %p128
      %p131 = scmp.ne.s32.totalorder %s116, %s130
      %p132 = scmp.eq.s32.totalorder %s22, 0
      %p133 = por %p131, %p132
      %s135 = sadd.s32 %s134, 1
      %p138 = scmp.eq.s32.totalorder %s16, 1
      %p139 = scmp.ne.s32.totalorder %s134, %s136
      %p140 = scmp.eq.s32.totalorder %s16, 0
      %p141 = por %p139, %p140
      %p142 = scmp.ne.s32.totalorder %s134, %s136
      %p143 = scmp.eq.s32.totalorder %s21, 1
      %p144 = por %p142, %p143
      %p145 = scmp.ne.s32.totalorder %s136, %s137
      %p146 = scmp.eq.s32.totalorder %s21, 0
      %p147 = por %p145, %p146
      %p148 = scmp.ne.s32.totalorder %s136, %s137
      %p149 = scmp.eq.s32.totalorder %s22, 1
      %p150 = por %p148, %p149
      %p152 = scmp.ne.s32.totalorder %s137, %s151
      %p153 = scmp.eq.s32.totalorder %s22, 0
      %p154 = por %p152, %p153
      %s155 = ssub.s32 %s16, %s23
      %p156 = scmp.eq.s32.totalorder %s155, 0
      %s158 = sadd.s32 %s157, 1
      %s159 = scalar_select %p156, %s157, %s158
      %p162 = pneg %p156
      %p163 = scmp.eq.s32.totalorder %s16, 1
      %p164 = por %p162, %p163
      %p165 = scmp.ne.s32.totalorder %s157, %s160
      %p166 = scmp.eq.s32.totalorder %s16, 0
      %p167 = por %p165, %p166
      %p168 = scmp.ne.s32.totalorder %s157, %s160
      %p169 = scmp.eq.s32.totalorder %s21, 1
      %p170 = por %p168, %p169
      %p171 = scmp.ne.s32.totalorder %s160, %s161
      %p172 = scmp.eq.s32.totalorder %s21, 0
      %p173 = por %p171, %p172
      %p174 = scmp.ne.s32.totalorder %s160, %s161
      %p175 = scmp.eq.s32.totalorder %s22, 1
      %p176 = por %p174, %p175
      %p178 = scmp.ne.s32.totalorder %s161, %s177
      %p179 = scmp.eq.s32.totalorder %s22, 0
      %p180 = por %p178, %p179
      %p181 = scmp.le.s32.totalorder 1, %s16
      %p182 = scmp.lt.s32.totalorder %s16, 3
      %p183 = pnand %p181, %p182
      %p184 = pneg %p183
      // Predicated region
      $region9: #{tpu_custom_call.1} parent=5 // pred_check
        _
      $region10: #{tpu_custom_call.1} parent=5 // pred_check_branch
        %186 = sbr.rel (%p183) target = $region12
      $region11: #{tpu_custom_call.1} parent=5 // pred_region
        %s187 = ssub.s32 %s16, 1
        // Predicated region
        $region13: #{tpu_custom_call.1} parent=11 // pred_check
          %p188 = pneg %p63
        $region14: #{tpu_custom_call.1} parent=11 // pred_check_branch
          %190 = sbr.rel (%p188) target = $region16
        $region15: #{tpu_custom_call.1} parent=11 // pred_region
          _
        $region16: #{tpu_custom_call.1} parent=11 // pred_fallthru
          _
        // Predicated region
        $region17: #{tpu_custom_call.1} parent=11 // pred_check
          %p191 = pneg %p84
        $region18: #{tpu_custom_call.1} parent=11 // pred_check_branch
          %193 = sbr.rel (%p191) target = $region20
        $region19: #{tpu_custom_call.1} parent=11 // pred_region
          _
        $region20: #{tpu_custom_call.1} parent=11 // pred_fallthru
          _
        // Predicated region
        $region21: #{tpu_custom_call.1} parent=11 // pred_check
          %p194 = pneg %p105
        $region22: #{tpu_custom_call.1} parent=11 // pred_check_branch
          %196 = sbr.rel (%p194) target = $region24
        $region23: #{tpu_custom_call.1} parent=11 // pred_region
          _
        $region24: #{tpu_custom_call.1} parent=11 // pred_fallthru
          _
        // Predicated region
        $region25: #{tpu_custom_call.1} parent=11 // pred_check
          %p197 = pneg %p126
        $region26: #{tpu_custom_call.1} parent=11 // pred_check_branch
          %199 = sbr.rel (%p197) target = $region28
        $region27: #{tpu_custom_call.1} parent=11 // pred_region
          %s201 = ssub.s32 128, 128
          %202 = vsyncadd [#allocation3], %s201
          %s204 = sshll.u32 [#allocation2], 4
          %s205 = int_to_ptr.vmem [resolvable:$true] %s204
          %207 = dma.hbm_to_vmem [thread:$0]  %s4, 128, %s205, [#allocation3]
        $region28: #{tpu_custom_call.1} parent=11 // pred_fallthru
          _
        // Predicated region
        $region29: #{tpu_custom_call.1} parent=11 // pred_check
          %p208 = pneg %p147
        $region30: #{tpu_custom_call.1} parent=11 // pred_check_branch
          %210 = sbr.rel (%p208) target = $region32
        $region31: #{tpu_custom_call.1} parent=11 // pred_region
          _
        $region32: #{tpu_custom_call.1} parent=11 // pred_fallthru
          _
      $region12: #{tpu_custom_call.1} parent=5 // pred_fallthru
        _
      %p211 = scmp.lt.s32.totalorder %s16, 2
      // Predicated region
      $region33: #{tpu_custom_call.1} parent=5 // pred_check
        %p212 = pneg %p211
      $region34: #{tpu_custom_call.1} parent=5 // pred_check_branch
        %214 = sbr.rel (%p212) target = $region36
      $region35: #{tpu_custom_call.1} parent=5 // pred_region
        // Predicated region
        $region37: #{tpu_custom_call.1} parent=35 // pred_check
          %p215 = pneg %p36
        $region38: #{tpu_custom_call.1} parent=35 // pred_check_branch
          %217 = sbr.rel (%p215) target = $region40
        $region39: #{tpu_custom_call.1} parent=35 // pred_region
          %p218 = scmp.lt.s32.totalorder %s16, 1
          %s219 = scalar_select %p218, %s16, 1
          %s220 = smul.addr %s219, 2
          %s221 = smul.addr %s220, 8
          %s222 = scalar_lea.vmem %s0, %s221
        $region40: #{tpu_custom_call.1} parent=35 // pred_fallthru
          _
      $region36: #{tpu_custom_call.1} parent=5 // pred_fallthru
        _
      %p223 = scmp.le.s32.totalorder 1, %s16
      %p224 = scmp.lt.s32.totalorder %s16, 3
      %p225 = pnand %p223, %p224
      %p226 = pneg %p225
      // Predicated region
      $region41: #{tpu_custom_call.1} parent=5 // pred_check
        _
      $region42: #{tpu_custom_call.1} parent=5 // pred_check_branch
        %228 = sbr.rel (%p225) target = $region44
      $region43: #{tpu_custom_call.1} parent=5 // pred_region
        %s229 = ssub.s32 %s16, 1
        // Predicated region
        $region45: #{tpu_custom_call.1} parent=43 // pred_check
          %p230 = pneg %p126
        $region46: #{tpu_custom_call.1} parent=43 // pred_check_branch
          %232 = sbr.rel (%p230) target = $region48
        $region47: #{tpu_custom_call.1} parent=43 // pred_region
          %233 = dma.done [#allocation3], 128
        $region48: #{tpu_custom_call.1} parent=43 // pred_fallthru
          _
        %p234 = scmp.lt.s32.totalorder %s21, 1
        %s235 = scalar_select %p234, %s21, 1
        %s236 = smul.addr %s235, 2
        %s237 = smul.addr %s236, 8
        %s238 = scalar_lea.vmem %s0, %s237
        %p239 = pneg %p42
        %p240 = pneg %p39
        %p241 = pneg %p63
        %p242 = pneg %p60
        %p243 = pneg %p84
        %p244 = pneg %p81
        %p245 = pneg %p105
        %p246 = pneg %p102
        %p247 = pneg %p126
        %p248 = pneg %p123
        %p249 = pneg %p147
        %p250 = pneg %p144
        %p251 = pneg %p173
        %p252 = pneg %p170
        %s253 = sand.u32 %s160, 1
        %s254 = scalar_lea.sflag [#allocation4], %s253
        %s255 = sand.u32 %s160, 1
        %s256 = smul.addr %s255, 16
        %s257 = scalar_lea.vmem [#allocation5], %s256
        %p258 = scmp.lt.s32.totalorder %s21, 1
        %s259 = scalar_select %p258, %s21, 1
        %s260 = smul.addr %s259, 2
        %s261 = smul.addr %s260, 8
        %s262 = scalar_lea.vmem %s0, %s261
        %v263 = vld [vmem:[#allocation2] sm:$0xff]
        %v264 = vld [vmem:[%s5] sm:$0xff]
        %v265 = vld [vmem:[%s5 + $0x8] sm:$0xff]
        %v266 = vld [vmem:[%s1] sm:$0xff]
        %s267 = scalar_lea.vmem %s1, 8
        %v268 = vld [vmem:[%s267] sm:$0xff]
        %s269 = scalar_lea.vmem %s1, 16
        %v270 = vld [vmem:[%s269] sm:$0xff]
        %s271 = scalar_lea.vmem %s1, 24
        %v272 = vld [vmem:[%s271] sm:$0xff]
        %v273 = vld [vmem:[%s2] sm:$0xff]
        %s274 = scalar_lea.vmem %s2, 8
        %v275 = vld [vmem:[%s274] sm:$0xff]
        %v276 = vld [vmem:[%s3] sm:$0x3]
        %s277 = scalar_lea.vmem %s3, 2
        %v278 = vld [vmem:[%s277] sm:$0x3]
        %s279 = scalar_lea.vmem %s3, 4
        %v280 = vld [vmem:[%s279] sm:$0x3]
        %s281 = scalar_lea.vmem %s3, 6
        %v282 = vld [vmem:[%s281] sm:$0x3]
        %s283 = scalar_lea.vmem %s3, 10
        %v284 = vld [vmem:[%s283] sm:$0x3]
        %s285 = scalar_lea.vmem %s3, 12
        %v286 = vld [vmem:[%s285] sm:$0x3]
        %s287 = scalar_lea.vmem %s3, 14
        %v288 = vld [vmem:[%s287] sm:$0x3]
        %s289 = scalar_lea.vmem %s3, 16
        %v290 = vld [vmem:[%s289] sm:$0x3]
        %v291 = vld [vmem:[%s262] sm:$0xff]
        %v292 = vld [vmem:[%s262 + $0x8] sm:$0xff]
        %v293 = vmul.f32 %v291, %v291
        %v294 = vmul.f32 %v292, %v292
        %v295 = vadd.f32 %v291, %v292
        %296 = vadd.xlane.f32.xlu0 %v295
        %v297 = vpop.xlane.xlu0 %296
        %v298 = vadd.f32 %v293, %v294
        %299 = vadd.xlane.f32.xlu0 %v298
        %v300 = vpop.xlane.xlu0 %299
        %vm301 = vcmask 7168
        %v302 = vsel %vm301, %v297, 0.0
        %303 = vadd.xlane.f32.xlu0 %v302
        %v304 = vpop.xlane.xlu0 %303
        %v305 = vrot.slane %v304, 4
        %v306 = vadd.f32 %v304, %v305
        %v307 = vrot.slane %v306, 2
        %v308 = vadd.f32 %v306, %v307
        %v309 = vrot.slane %v308, 1
        %v310 = vadd.f32 %v308, %v309
        %s311 = vtos %v310
        %v312 = vsel %vm301, %v300, 0.0
        %313 = vadd.xlane.f32.xlu0 %v312
        %v314 = vpop.xlane.xlu0 %313
        %v315 = vrot.slane %v314, 4
        %v316 = vadd.f32 %v314, %v315
        %v317 = vrot.slane %v316, 2
        %v318 = vadd.f32 %v316, %v317
        %v319 = vrot.slane %v318, 1
        %v320 = vadd.f32 %v318, %v319
        %s321 = vtos %v320
        %v322 = vrcp.pop 1024.0
        %s323 = vtos %v322
        %s324 = smul.f32 %s311, %s323
        %v325 = vrcp.pop 1024.0
        %s326 = vtos %v325
        %s327 = smul.f32 %s321, %s326
        %s328 = smul.f32 %s324, %s324
        %s329 = ssub.f32 %s327, %s328
        %s330 = smax.f32 %s329, 0.0
        %s331 = sadd.f32 %s330, 1e-05
        %v332 = vstv %s331
        %v333 = vrsqrt.pop %v332
        %s334 = vtos %v333
        %v335 = vstv %s324
        %v336 = vsub.f32 %v291, %v335
        %v337 = vsub.f32 %v292, %v335
        %v338 = vstv %s334
        %v339 = vmul.f32 %v336, %v338
        %v340 = vmul.f32 %v337, %v338
        %342 = vset.pattern.permute.xlu0 0
        %343 = vperm.xlu0 %342, %v266
        %v344 = vpop.permute.xlu0 %343
        %v346 = vmul.f32 %v339, %v344
        %v347 = vmul.f32 %v340, %v344
        %349 = vset.pattern.permute.xlu0 0
        %350 = vperm.xlu0 %349, %v268
        %v351 = vpop.permute.xlu0 %350
        %v353 = vadd.f32 %v346, %v351
        %v354 = vadd.f32 %v347, %v351
        %v355 = vmax.f32 %v353, 0.0
        %v356 = vmax.f32 %v354, 0.0
        %358 = vset.pattern.permute.xlu0 0
        %359 = vperm.xlu0 %358, %v270
        %v360 = vpop.permute.xlu0 %359
        %v362 = vmul.f32 %v339, %v360
        %v363 = vmul.f32 %v340, %v360
        %365 = vset.pattern.permute.xlu0 0
        %366 = vperm.xlu0 %365, %v272
        %v367 = vpop.permute.xlu0 %366
        %v369 = vadd.f32 %v362, %v367
        %v370 = vadd.f32 %v363, %v367
        %v371 = vmax.f32 %v369, 0.0
        %v372 = vmax.f32 %v370, 0.0
        %373 = vrot.lane.b32.xlu0 %v355, 17
        %v374 = vpop.permute.xlu0 %373
        %375 = vrot.lane.b32.xlu0 %v356, 17
        %v376 = vpop.permute.xlu0 %375
        %v377 = vlaneseq
        %v378 = vand.u32 %v377, 127
        %vm379 = vcmp.lt.s32.totalorder %v378, 17
        %v380 = vsel %vm379, %v374, %v376
        %v381 = vsel %vm379, %v376, %v374
        %v383 = vlaneseq
        %v384 = vshrl.u32 %v383, 7
        %v385 = vsub.s32 0, %v384
        %v386 = vrot.slane %v276, %v385
        %v387 = vlaneseq
        %v388 = vshrl.u32 %v387, 7
        %v389 = vsub.s32 1, %v388
        %v390 = vrot.slane %v276, %v389
        %v393 = vmul.f32 %v381, %v386
        %v394 = vmul.f32 %v380, %v390
        %395 = vrot.lane.b32.xlu0 %v355, 16
        %v396 = vpop.permute.xlu0 %395
        %397 = vrot.lane.b32.xlu0 %v356, 16
        %v398 = vpop.permute.xlu0 %397
        %vm399 = vcmp.lt.s32.totalorder %v378, 16
        %v400 = vsel %vm399, %v396, %v398
        %v401 = vsel %vm399, %v398, %v396
        %v403 = vlaneseq
        %v404 = vshrl.u32 %v403, 7
        %v405 = vsub.s32 0, %v404
        %v406 = vrot.slane %v278, %v405
        %v407 = vlaneseq
        %v408 = vshrl.u32 %v407, 7
        %v409 = vsub.s32 1, %v408
        %v410 = vrot.slane %v278, %v409
        %v413 = vmul.f32 %v401, %v406
        %v414 = vmul.f32 %v400, %v410
        %415 = vrot.lane.b32.xlu0 %v355, 15
        %v416 = vpop.permute.xlu0 %415
        %417 = vrot.lane.b32.xlu0 %v356, 15
        %v418 = vpop.permute.xlu0 %417
        %vm419 = vcmp.lt.s32.totalorder %v378, 15
        %v420 = vsel %vm419, %v416, %v418
        %v421 = vsel %vm419, %v418, %v416
        %v423 = vlaneseq
        %v424 = vshrl.u32 %v423, 7
        %v425 = vsub.s32 0, %v424
        %v426 = vrot.slane %v280, %v425
        %v427 = vlaneseq
        %v428 = vshrl.u32 %v427, 7
        %v429 = vsub.s32 1, %v428
        %v430 = vrot.slane %v280, %v429
        %v433 = vmul.f32 %v421, %v426
        %v434 = vmul.f32 %v420, %v430
        %435 = vrot.lane.b32.xlu0 %v355, 1
        %v436 = vpop.permute.xlu0 %435
        %437 = vrot.lane.b32.xlu0 %v356, 1
        %v438 = vpop.permute.xlu0 %437
        %vm439 = vcmp.lt.s32.totalorder %v378, 1
        %v440 = vsel %vm439, %v436, %v438
        %v441 = vsel %vm439, %v438, %v436
        %v443 = vlaneseq
        %v444 = vshrl.u32 %v443, 7
        %v445 = vsub.s32 0, %v444
        %v446 = vrot.slane %v282, %v445
        %v447 = vlaneseq
        %v448 = vshrl.u32 %v447, 7
        %v449 = vsub.s32 1, %v448
        %v450 = vrot.slane %v282, %v449
        %v453 = vmul.f32 %v441, %v446
        %v454 = vmul.f32 %v440, %v450
        %455 = vrot.lane.b32.xlu0 %v355, 127
        %v456 = vpop.permute.xlu0 %455
        %457 = vrot.lane.b32.xlu0 %v356, 127
        %v458 = vpop.permute.xlu0 %457
        %vm459 = vcmp.lt.s32.totalorder %v378, 127
        %v460 = vsel %vm459, %v456, %v458
        %v461 = vsel %vm459, %v458, %v456
        %v463 = vlaneseq
        %v464 = vshrl.u32 %v463, 7
        %v465 = vsub.s32 0, %v464
        %v466 = vrot.slane %v284, %v465
        %v467 = vlaneseq
        %v468 = vshrl.u32 %v467, 7
        %v469 = vsub.s32 1, %v468
        %v470 = vrot.slane %v284, %v469
        %v473 = vmul.f32 %v460, %v466
        %v474 = vmul.f32 %v461, %v470
        %475 = vrot.lane.b32.xlu0 %v355, 113
        %v476 = vpop.permute.xlu0 %475
        %477 = vrot.lane.b32.xlu0 %v356, 113
        %v478 = vpop.permute.xlu0 %477
        %vm479 = vcmp.lt.s32.totalorder %v378, 113
        %v480 = vsel %vm479, %v476, %v478
        %v481 = vsel %vm479, %v478, %v476
        %v483 = vlaneseq
        %v484 = vshrl.u32 %v483, 7
        %v485 = vsub.s32 0, %v484
        %v486 = vrot.slane %v286, %v485
        %v487 = vlaneseq
        %v488 = vshrl.u32 %v487, 7
        %v489 = vsub.s32 1, %v488
        %v490 = vrot.slane %v286, %v489
        %v493 = vmul.f32 %v480, %v486
        %v494 = vmul.f32 %v481, %v490
        %495 = vrot.lane.b32.xlu0 %v355, 112
        %v496 = vpop.permute.xlu0 %495
        %497 = vrot.lane.b32.xlu0 %v356, 112
        %v498 = vpop.permute.xlu0 %497
        %vm499 = vcmp.lt.s32.totalorder %v378, 112
        %v500 = vsel %vm499, %v496, %v498
        %v501 = vsel %vm499, %v498, %v496
        %v503 = vlaneseq
        %v504 = vshrl.u32 %v503, 7
        %v505 = vsub.s32 0, %v504
        %v506 = vrot.slane %v288, %v505
        %v507 = vlaneseq
        %v508 = vshrl.u32 %v507, 7
        %v509 = vsub.s32 1, %v508
        %v510 = vrot.slane %v288, %v509
        %v513 = vmul.f32 %v500, %v506
        %v514 = vmul.f32 %v501, %v510
        %515 = vrot.lane.b32.xlu0 %v355, 111
        %v516 = vpop.permute.xlu0 %515
        %517 = vrot.lane.b32.xlu0 %v356, 111
        %v518 = vpop.permute.xlu0 %517
        %vm519 = vcmp.lt.s32.totalorder %v378, 111
        %v520 = vsel %vm519, %v516, %v518
        %v521 = vsel %vm519, %v518, %v516
        %v523 = vlaneseq
        %v524 = vshrl.u32 %v523, 7
        %v525 = vsub.s32 0, %v524
        %v526 = vrot.slane %v290, %v525
        %v527 = vlaneseq
        %v528 = vshrl.u32 %v527, 7
        %v529 = vsub.s32 1, %v528
        %v530 = vrot.slane %v290, %v529
        %v533 = vmul.f32 %v520, %v526
        %v534 = vmul.f32 %v521, %v530
        %vm535 = vcmask 588800
        %v537 = vsel %vm535, %v263, 0
        %539 = vmatprep.subr.mxu0 %v394
        %540 = vmatpush1.msra.mxu0 %v393
        %541 = vmatprep.subr.mxu0 %v414
        %542 = vmatpush1.msra.mxu0 %v413
        %543 = vmatprep.subr.mxu0 %v434
        %544 = vmatpush1.msra.mxu0 %v433
        %545 = vmatprep.subr.mxu0 %v454
        %546 = vmatpush1.msra.mxu0 %v453
        %547 = vmatprep.subr.mxu0 %v356
        %548 = vmatpush1.msra.mxu0 %v355
        %549 = vmatprep.subr.mxu0 %v474
        %550 = vmatpush1.msra.mxu0 %v473
        %551 = vmatprep.subr.mxu0 %v494
        %552 = vmatpush1.msra.mxu0 %v493
        %553 = vmatprep.subr.mxu0 %v514
        %554 = vmatpush1.msra.mxu0 %v513
        %555 = vmatprep.subr.mxu0 %v534
        %556 = vmatpush1.msra.mxu0 %v533
        %557 = vmatprep.subr.mxu0 0.0
        %558 = vmatpush1.msra.mxu0 0.0
        %559 = vmatprep.subr.mxu0 0.0
        %560 = vmatpush1.msra.mxu0 0.0
        %561 = vmatprep.subr.mxu0 0.0
        %562 = vmatpush1.msra.mxu0 0.0
        %563 = vmatprep.subr.mxu0 0.0
        %564 = vmatpush1.msra.mxu0 0.0
        %565 = vmatprep.subr.mxu0 0.0
        %566 = vmatpush1.msra.mxu0 0.0
        %567 = vmatprep.subr.mxu0 0.0
        %568 = vmatpush1.msra.mxu0 0.0
        %569 = vmatprep.subr.mxu0 0.0
        %570 = vmatpush1.msra.mxu0 0.0
        %571 = vmatprep.subr.mxu0 0.0
        %572 = vmatpush1.msra.mxu0 0.0
        %573 = vmatprep.subr.mxu0 0.0
        %574 = vmatpush1.msra.mxu0 0.0
        %575 = vmatprep.subr.mxu0 0.0
        %576 = vmatpush1.msra.mxu0 0.0
        %577 = vmatprep.subr.mxu0 0.0
        %578 = vmatpush1.msra.mxu0 0.0
        %579 = vmatprep.subr.mxu0 0.0
        %580 = vmatpush1.msra.mxu0 0.0
        %581 = vmatprep.subr.mxu0 0.0
        %582 = vmatpush1.msra.mxu0 0.0
        %583 = vmatprep.subr.mxu0 0.0
        %584 = vmatpush1.msra.mxu0 0.0
        %585 = vmatprep.subr.mxu0 0.0
        %586 = vmatpush1.msra.mxu0 0.0
        %587 = vmatprep.subr.mxu0 0.0
        %588 = vmatpush1.msra.mxu0 0.0
        %589 = vmatprep.subr.mxu0 0.0
        %590 = vmatpush1.msra.mxu0 0.0
        %591 = vmatprep.subr.mxu0 0.0
        %592 = vmatpush1.msra.mxu0 0.0
        %593 = vmatprep.subr.mxu0 0.0
        %594 = vmatpush1.msra.mxu0 0.0
        %595 = vmatprep.subr.mxu0 0.0
        %596 = vmatpush1.msra.mxu0 0.0
        %597 = vmatprep.subr.mxu0 0.0
        %598 = vmatpush1.msra.mxu0 0.0
        %599 = vmatprep.subr.mxu0 0.0
        %600 = vmatpush1.msra.mxu0 0.0
        %601 = vmatprep.subr.mxu0 0.0
        %602 = vmatpush1.msra.mxu0 0.0
        %603 = vmatprep.mubr.f32.mxu0 0.0
        %604 = vmatmul.mubr.f32.gmra.mrb[0].mxu0 %v537
        %v605 = vpop.f32.mrb[0].mxu0
        %v606 = vadd.f32 0.0, %v605
        %v607 = vpop.f32.mrb[0].mxu0
        %v608 = vadd.f32 0.0, %v607
        %609 = vdwg.mxu0
        %v610 = vmul.f32 %v606, %v606
        %v611 = vmul.f32 %v608, %v608
        %v612 = vadd.f32 %v606, %v608
        %613 = vadd.xlane.f32.xlu0 %v612
        %v614 = vpop.xlane.xlu0 %613
        %v615 = vadd.f32 %v610, %v611
        %616 = vadd.xlane.f32.xlu0 %v615
        %v617 = vpop.xlane.xlu0 %616
        %v618 = vsel %vm301, %v614, 0.0
        %619 = vadd.xlane.f32.xlu0 %v618
        %v620 = vpop.xlane.xlu0 %619
        %v621 = vrot.slane %v620, 4
        %v622 = vadd.f32 %v620, %v621
        %v623 = vrot.slane %v622, 2
        %v624 = vadd.f32 %v622, %v623
        %v625 = vrot.slane %v624, 1
        %v626 = vadd.f32 %v624, %v625
        %s627 = vtos %v626
        %v628 = vsel %vm301, %v617, 0.0
        %629 = vadd.xlane.f32.xlu0 %v628
        %v630 = vpop.xlane.xlu0 %629
        %v631 = vrot.slane %v630, 4
        %v632 = vadd.f32 %v630, %v631
        %v633 = vrot.slane %v632, 2
        %v634 = vadd.f32 %v632, %v633
        %v635 = vrot.slane %v634, 1
        %v636 = vadd.f32 %v634, %v635
        %s637 = vtos %v636
        %v638 = vrcp.pop 2048.0
        %s639 = vtos %v638
        %s640 = smul.f32 %s627, %s639
        %v641 = vrcp.pop 2048.0
        %s642 = vtos %v641
        %s643 = smul.f32 %s637, %s642
        %s644 = smul.f32 %s640, %s640
        %s645 = ssub.f32 %s643, %s644
        %s646 = smax.f32 %s645, 0.0
        %s647 = sadd.f32 %s646, 1e-05
        %v648 = vstv %s647
        %v649 = vrsqrt.pop %v648
        %s650 = vtos %v649
        %v651 = vstv %s640
        %v652 = vsub.f32 %v606, %v651
        %v653 = vsub.f32 %v608, %v651
        %v654 = vstv %s650
        %v655 = vmul.f32 %v652, %v654
        %v656 = vmul.f32 %v653, %v654
        %658 = vset.pattern.permute.xlu0 0
        %659 = vperm.xlu0 %658, %v273
        %v660 = vpop.permute.xlu0 %659
        %v662 = vmul.f32 %v655, %v660
        %v663 = vmul.f32 %v656, %v660
        %665 = vset.pattern.permute.xlu0 0
        %666 = vperm.xlu0 %665, %v275
        %v667 = vpop.permute.xlu0 %666
        %v669 = vadd.f32 %v662, %v667
        %v670 = vadd.f32 %v663, %v667
        %v671 = vmax.f32 %v669, 0.0
        %v672 = vmax.f32 %v670, 0.0
        %673 = vrot.lane.b32.xlu0 %v671, 17
        %v674 = vpop.permute.xlu0 %673
        %675 = vrot.lane.b32.xlu0 %v371, 17
        %v676 = vpop.permute.xlu0 %675
        %677 = vrot.lane.b32.xlu0 %v672, 17
        %v678 = vpop.permute.xlu0 %677
        %679 = vrot.lane.b32.xlu0 %v372, 17
        %v680 = vpop.permute.xlu0 %679
        %v681 = vsel %vm379, %v674, %v678
        %v682 = vsel %vm379, %v676, %v680
        %v683 = vsel %vm379, %v678, %v674
        %v684 = vsel %vm379, %v680, %v676
        %v685 = vmul.f32 %v683, %v386
        %v686 = vmul.f32 %v681, %v390
        %v687 = vmul.f32 %v684, %v386
        %v688 = vmul.f32 %v682, %v390
        %689 = vrot.lane.b32.xlu0 %v671, 16
        %v690 = vpop.permute.xlu0 %689
        %691 = vrot.lane.b32.xlu0 %v371, 16
        %v692 = vpop.permute.xlu0 %691
        %693 = vrot.lane.b32.xlu0 %v672, 16
        %v694 = vpop.permute.xlu0 %693
        %695 = vrot.lane.b32.xlu0 %v372, 16
        %v696 = vpop.permute.xlu0 %695
        %v697 = vsel %vm399, %v690, %v694
        %v698 = vsel %vm399, %v692, %v696
        %v699 = vsel %vm399, %v694, %v690
        %v700 = vsel %vm399, %v696, %v692
        %v701 = vmul.f32 %v699, %v406
        %v702 = vmul.f32 %v697, %v410
        %v703 = vmul.f32 %v700, %v406
        %v704 = vmul.f32 %v698, %v410
        %705 = vrot.lane.b32.xlu0 %v671, 15
        %v706 = vpop.permute.xlu0 %705
        %707 = vrot.lane.b32.xlu0 %v371, 15
        %v708 = vpop.permute.xlu0 %707
        %709 = vrot.lane.b32.xlu0 %v672, 15
        %v710 = vpop.permute.xlu0 %709
        %711 = vrot.lane.b32.xlu0 %v372, 15
        %v712 = vpop.permute.xlu0 %711
        %v713 = vsel %vm419, %v706, %v710
        %v714 = vsel %vm419, %v708, %v712
        %v715 = vsel %vm419, %v710, %v706
        %v716 = vsel %vm419, %v712, %v708
        %v717 = vmul.f32 %v715, %v426
        %v718 = vmul.f32 %v713, %v430
        %v719 = vmul.f32 %v716, %v426
        %v720 = vmul.f32 %v714, %v430
        %721 = vrot.lane.b32.xlu0 %v671, 1
        %v722 = vpop.permute.xlu0 %721
        %723 = vrot.lane.b32.xlu0 %v371, 1
        %v724 = vpop.permute.xlu0 %723
        %725 = vrot.lane.b32.xlu0 %v672, 1
        %v726 = vpop.permute.xlu0 %725
        %727 = vrot.lane.b32.xlu0 %v372, 1
        %v728 = vpop.permute.xlu0 %727
        %v729 = vsel %vm439, %v722, %v726
        %v730 = vsel %vm439, %v724, %v728
        %v731 = vsel %vm439, %v726, %v722
        %v732 = vsel %vm439, %v728, %v724
        %v733 = vmul.f32 %v731, %v446
        %v734 = vmul.f32 %v729, %v450
        %v735 = vmul.f32 %v732, %v446
        %v736 = vmul.f32 %v730, %v450
        %737 = vrot.lane.b32.xlu0 %v671, 127
        %v738 = vpop.permute.xlu0 %737
        %739 = vrot.lane.b32.xlu0 %v371, 127
        %v740 = vpop.permute.xlu0 %739
        %741 = vrot.lane.b32.xlu0 %v672, 127
        %v742 = vpop.permute.xlu0 %741
        %743 = vrot.lane.b32.xlu0 %v372, 127
        %v744 = vpop.permute.xlu0 %743
        %v745 = vsel %vm459, %v738, %v742
        %v746 = vsel %vm459, %v740, %v744
        %v747 = vsel %vm459, %v742, %v738
        %v748 = vsel %vm459, %v744, %v740
        %v749 = vmul.f32 %v745, %v466
        %v750 = vmul.f32 %v747, %v470
        %v751 = vmul.f32 %v746, %v466
        %v752 = vmul.f32 %v748, %v470
        %753 = vrot.lane.b32.xlu0 %v671, 113
        %v754 = vpop.permute.xlu0 %753
        %755 = vrot.lane.b32.xlu0 %v371, 113
        %v756 = vpop.permute.xlu0 %755
        %757 = vrot.lane.b32.xlu0 %v672, 113
        %v758 = vpop.permute.xlu0 %757
        %759 = vrot.lane.b32.xlu0 %v372, 113
        %v760 = vpop.permute.xlu0 %759
        %v761 = vsel %vm479, %v754, %v758
        %v762 = vsel %vm479, %v756, %v760
        %v763 = vsel %vm479, %v758, %v754
        %v764 = vsel %vm479, %v760, %v756
        %v765 = vmul.f32 %v761, %v486
        %v766 = vmul.f32 %v763, %v490
        %v767 = vmul.f32 %v762, %v486
        %v768 = vmul.f32 %v764, %v490
        %769 = vrot.lane.b32.xlu0 %v671, 112
        %v770 = vpop.permute.xlu0 %769
        %771 = vrot.lane.b32.xlu0 %v371, 112
        %v772 = vpop.permute.xlu0 %771
        %773 = vrot.lane.b32.xlu0 %v672, 112
        %v774 = vpop.permute.xlu0 %773
        %775 = vrot.lane.b32.xlu0 %v372, 112
        %v776 = vpop.permute.xlu0 %775
        %v777 = vsel %vm499, %v770, %v774
        %v778 = vsel %vm499, %v772, %v776
        %v779 = vsel %vm499, %v774, %v770
        %v780 = vsel %vm499, %v776, %v772
        %v781 = vmul.f32 %v777, %v506
        %v782 = vmul.f32 %v779, %v510
        %v783 = vmul.f32 %v778, %v506
        %v784 = vmul.f32 %v780, %v510
        %785 = vrot.lane.b32.xlu0 %v671, 111
        %v786 = vpop.permute.xlu0 %785
        %787 = vrot.lane.b32.xlu0 %v371, 111
        %v788 = vpop.permute.xlu0 %787
        %789 = vrot.lane.b32.xlu0 %v672, 111
        %v790 = vpop.permute.xlu0 %789
        %791 = vrot.lane.b32.xlu0 %v372, 111
        %v792 = vpop.permute.xlu0 %791
        %v793 = vsel %vm519, %v786, %v790
        %v794 = vsel %vm519, %v788, %v792
        %v795 = vsel %vm519, %v790, %v786
        %v796 = vsel %vm519, %v792, %v788
        %v797 = vmul.f32 %v793, %v526
        %v798 = vmul.f32 %v795, %v530
        %v799 = vmul.f32 %v794, %v526
        %v800 = vmul.f32 %v796, %v530
        %vm801 = vcmask 130048
        %v803 = vsel %vm801, %v265, 0
        %805 = vmatprep.subr.mxu0 %v798
        %806 = vmatpush1.msra.mxu0 %v797
        %807 = vmatprep.subr.mxu0 %v800
        %808 = vmatpush1.msra.mxu0 %v799
        %809 = vmatprep.subr.mxu0 0.0
        %810 = vmatpush1.msra.mxu0 0.0
        %811 = vmatprep.subr.mxu0 0.0
        %812 = vmatpush1.msra.mxu0 0.0
        %813 = vmatprep.subr.mxu0 0.0
        %814 = vmatpush1.msra.mxu0 0.0
        %815 = vmatprep.subr.mxu0 0.0
        %816 = vmatpush1.msra.mxu0 0.0
        %817 = vmatprep.subr.mxu0 0.0
        %818 = vmatpush1.msra.mxu0 0.0
        %819 = vmatprep.subr.mxu0 0.0
        %820 = vmatpush1.msra.mxu0 0.0
        %821 = vmatprep.subr.mxu0 0.0
        %822 = vmatpush1.msra.mxu0 0.0
        %823 = vmatprep.subr.mxu0 0.0
        %824 = vmatpush1.msra.mxu0 0.0
        %825 = vmatprep.subr.mxu0 0.0
        %826 = vmatpush1.msra.mxu0 0.0
        %827 = vmatprep.subr.mxu0 0.0
        %828 = vmatpush1.msra.mxu0 0.0
        %829 = vmatprep.subr.mxu0 0.0
        %830 = vmatpush1.msra.mxu0 0.0
        %831 = vmatprep.subr.mxu0 0.0
        %832 = vmatpush1.msra.mxu0 0.0
        %833 = vmatprep.subr.mxu0 0.0
        %834 = vmatpush1.msra.mxu0 0.0
        %835 = vmatprep.subr.mxu0 0.0
        %836 = vmatpush1.msra.mxu0 0.0
        %837 = vmatprep.subr.mxu0 0.0
        %838 = vmatpush1.msra.mxu0 0.0
        %839 = vmatprep.subr.mxu0 0.0
        %840 = vmatpush1.msra.mxu0 0.0
        %841 = vmatprep.subr.mxu0 0.0
        %842 = vmatpush1.msra.mxu0 0.0
        %843 = vmatprep.subr.mxu0 0.0
        %844 = vmatpush1.msra.mxu0 0.0
        %845 = vmatprep.subr.mxu0 0.0
        %846 = vmatpush1.msra.mxu0 0.0
        %847 = vmatprep.subr.mxu0 0.0
        %848 = vmatpush1.msra.mxu0 0.0
        %849 = vmatprep.subr.mxu0 0.0
        %850 = vmatpush1.msra.mxu0 0.0
        %851 = vmatprep.subr.mxu0 0.0
        %852 = vmatpush1.msra.mxu0 0.0
        %853 = vmatprep.subr.mxu0 0.0
        %854 = vmatpush1.msra.mxu0 0.0
        %855 = vmatprep.subr.mxu0 0.0
        %856 = vmatpush1.msra.mxu0 0.0
        %857 = vmatprep.subr.mxu0 0.0
        %858 = vmatpush1.msra.mxu0 0.0
        %859 = vmatprep.subr.mxu0 0.0
        %860 = vmatpush1.msra.mxu0 0.0
        %861 = vmatprep.subr.mxu0 0.0
        %862 = vmatpush1.msra.mxu0 0.0
        %863 = vmatprep.subr.mxu0 0.0
        %864 = vmatpush1.msra.mxu0 0.0
        %865 = vmatprep.subr.mxu0 0.0
        %866 = vmatpush1.msra.mxu0 0.0
        %867 = vmatprep.subr.mxu0 0.0
        %868 = vmatpush1.msra.mxu0 0.0
        %869 = vmatprep.mubr.f32.mxu0 0.0
        %870 = vmatmul.mubr.f32.gmra.mrb[0].mxu0 %v803
        %v871 = vpop.f32.mrb[0].mxu0
        %v872 = vadd.f32 0.0, %v871
        %v873 = vpop.f32.mrb[0].mxu0
        %v874 = vadd.f32 0.0, %v873
        %875 = vdwg.mxu0
        %876 = vmatprep.subr.mxu0 %v686
        %877 = vmatpush1.msra.mxu0 %v685
        %878 = vmatprep.subr.mxu0 %v688
        %879 = vmatpush1.msra.mxu0 %v687
        %880 = vmatprep.subr.mxu0 %v702
        %881 = vmatpush1.msra.mxu0 %v701
        %882 = vmatprep.subr.mxu0 %v704
        %883 = vmatpush1.msra.mxu0 %v703
        %884 = vmatprep.subr.mxu0 %v718
        %885 = vmatpush1.msra.mxu0 %v717
        %886 = vmatprep.subr.mxu0 %v720
        %887 = vmatpush1.msra.mxu0 %v719
        %888 = vmatprep.subr.mxu0 %v734
        %889 = vmatpush1.msra.mxu0 %v733
        %890 = vmatprep.subr.mxu0 %v736
        %891 = vmatpush1.msra.mxu0 %v735
        %892 = vmatprep.subr.mxu0 %v672
        %893 = vmatpush1.msra.mxu0 %v671
        %894 = vmatprep.subr.mxu0 %v372
        %895 = vmatpush1.msra.mxu0 %v371
        %896 = vmatprep.subr.mxu0 %v750
        %897 = vmatpush1.msra.mxu0 %v749
        %898 = vmatprep.subr.mxu0 %v752
        %899 = vmatpush1.msra.mxu0 %v751
        %900 = vmatprep.subr.mxu0 %v766
        %901 = vmatpush1.msra.mxu0 %v765
        %902 = vmatprep.subr.mxu0 %v768
        %903 = vmatpush1.msra.mxu0 %v767
        %904 = vmatprep.subr.mxu0 %v782
        %905 = vmatpush1.msra.mxu0 %v781
        %906 = vmatprep.subr.mxu0 %v784
        %907 = vmatpush1.msra.mxu0 %v783
        %908 = vmatprep.subr.mxu0 0.0
        %909 = vmatpush1.msra.mxu0 0.0
        %910 = vmatprep.subr.mxu0 0.0
        %911 = vmatpush1.msra.mxu0 0.0
        %912 = vmatprep.subr.mxu0 0.0
        %913 = vmatpush1.msra.mxu0 0.0
        %914 = vmatprep.subr.mxu0 0.0
        %915 = vmatpush1.msra.mxu0 0.0
        %916 = vmatprep.subr.mxu0 0.0
        %917 = vmatpush1.msra.mxu0 0.0
        %918 = vmatprep.subr.mxu0 0.0
        %919 = vmatpush1.msra.mxu0 0.0
        %920 = vmatprep.subr.mxu0 0.0
        %921 = vmatpush1.msra.mxu0 0.0
        %922 = vmatprep.subr.mxu0 0.0
        %923 = vmatpush1.msra.mxu0 0.0
        %924 = vmatprep.subr.mxu0 0.0
        %925 = vmatpush1.msra.mxu0 0.0
        %926 = vmatprep.subr.mxu0 0.0
        %927 = vmatpush1.msra.mxu0 0.0
        %928 = vmatprep.subr.mxu0 0.0
        %929 = vmatpush1.msra.mxu0 0.0
        %930 = vmatprep.subr.mxu0 0.0
        %931 = vmatpush1.msra.mxu0 0.0
        %932 = vmatprep.subr.mxu0 0.0
        %933 = vmatpush1.msra.mxu0 0.0
        %934 = vmatprep.subr.mxu0 0.0
        %935 = vmatpush1.msra.mxu0 0.0
        %936 = vmatprep.subr.mxu0 0.0
        %937 = vmatpush1.msra.mxu0 0.0
        %938 = vmatprep.subr.mxu0 0.0
        %939 = vmatpush1.msra.mxu0 0.0
        %940 = vmatprep.mubr.f32.mxu0 0.0
        %941 = vmatmul.mubr.f32.gmra.mrb[0].mxu0 %v264
        %v942 = vpop.f32.mrb[0].mxu0
        %v943 = vadd.f32 %v872, %v942
        %v944 = vpop.f32.mrb[0].mxu0
        %v945 = vadd.f32 %v874, %v944
        %946 = vdwg.mxu0
        %947 = vst [vmem:[%s257] sm:$0xff] %v943
        %948 = vst [vmem:[%s257 + $0x8] sm:$0xff] %v945
        %s949 = sand.u32 %s160, 1
        %s950 = scalar_lea.sflag [#allocation4], %s949
        %s951 = sand.u32 %s160, 1
        %s952 = smul.addr %s951, 16
        %s953 = scalar_lea.vmem [#allocation5], %s952
        // Predicated region
        $region49: #{tpu_custom_call.1} parent=43 // pred_check
          %p954 = pneg %p170
        $region50: #{tpu_custom_call.1} parent=43 // pred_check_branch
          %956 = sbr.rel (%p954) target = $region52
        $region51: #{tpu_custom_call.1} parent=43 // pred_region
          %s958 = ssub.s32 256, 256
          %959 = vsyncadd %s950, %s958
          %s960 = smul.addr %s21, 2
          %s961 = smul.addr %s960, 128
          %s962 = scalar_lea.hbm %s6, %s961
          %s964 = sshll.u32 %s953, 4
          %s965 = int_to_ptr.vmem [resolvable:$true] %s964
          %967 = dma.vmem_to_hbm [thread:$0]  %s965, 256, %s962, %s950
        $region52: #{tpu_custom_call.1} parent=43 // pred_fallthru
          _
      $region44: #{tpu_custom_call.1} parent=5 // pred_fallthru
        _
      %p968 = scmp.le.s32.totalorder 2, %s16
      // Predicated region
      $region53: #{tpu_custom_call.1} parent=5 // pred_check
        %p969 = pneg %p968
      $region54: #{tpu_custom_call.1} parent=5 // pred_check_branch
        %971 = sbr.rel (%p969) target = $region56
      $region55: #{tpu_custom_call.1} parent=5 // pred_region
        %s972 = ssub.s32 %s16, 2
        // Predicated region
        $region57: #{tpu_custom_call.1} parent=55 // pred_check
          %p973 = pneg %p176
        $region58: #{tpu_custom_call.1} parent=55 // pred_check_branch
          %975 = sbr.rel (%p973) target = $region60
        $region59: #{tpu_custom_call.1} parent=55 // pred_region
          %s976 = sand.u32 %s161, 1
          %s977 = scalar_lea.sflag [#allocation4], %s976
          %s978 = sand.u32 %s161, 1
          %s979 = smul.addr %s978, 16
          %s980 = scalar_lea.vmem [#allocation5], %s979
          %981 = dma.done %s977, 256
        $region60: #{tpu_custom_call.1} parent=55 // pred_fallthru
          _
      $region56: #{tpu_custom_call.1} parent=5 // pred_fallthru
        _
    $region6: #{tpu_custom_call.1} parent=1 // loop_footer
      %s20 = sadd.s32 1, %s16
    $region7: #{tpu_custom_call.1} parent=1 // loop_footer_branch
      %15 = sbr.rel target = $region3
    $region8: #{tpu_custom_call.1} parent=1 // loop_exit
      _
    %982 = vsyncpa [#allocation3], 1
    %s983 = scalar_lea.sflag [#allocation3], 1
    %984 = vsyncpa %s983, 1
    %985 = vsyncpa [#allocation4], 1
    %s986 = scalar_lea.sflag [#allocation4], 1
    %987 = vsyncpa %s986, 1

</llo_original>
